<compile_context>
chip_gen: v5e
topology: v5e:2x2
jax: 0.10.0
libtpu: 0.0.40
codegen_flags: <defaults>
</compile_context>

<pallas_src>
import functools

import jax
import jax.numpy as jnp
from jax.experimental import pallas as pl
from jax.experimental.pallas import tpu as pltpu

WEIGHT_FACTOR = 2.0
WEIGHT_LO = 20
WEIGHT_HI = 40

_TARGET_STEPS = 8            # >= 2 * TensorCores (v7x has 2), even
_MIN_STEP_BYTES = 512 * 1024  # don't split below this per-buffer per step


def _vmem_capacity_bytes():
    """Physical VMEM per core; conservative (v7x) default if unqueryable."""
    try:
        info = pltpu.get_tpu_info()
        cap = getattr(info, "vmem_capacity_bytes", None)
        if cap:
            return int(cap)
    except Exception:
        pass
    return 64 * 1024 * 1024


def _weighted_mse_kernel(x_ref, t_ref, o_ref, *, weight_factor, lo, hi,
                         period, tile_rows, flat_index):
    x = x_ref[...]
    t = t_ref[...]
    d = x - t
    sq = d * d
    rows, lane = sq.shape

    if not flat_index:
        # Weight depends only on the lane index (mod `period`): build it once
        # on a tiny (1, lane) row, then a single broadcast multiply.
        idx = jax.lax.broadcasted_iota(jnp.int32, (1, lane), 1)
        if period != lane:
            idx = idx % period
    else:
        # Packed ragged layout: weight depends on the global flat element
        # index modulo L. Cheap int VPU filler, hidden under the DMA pipeline.
        row0 = pl.program_id(0) * tile_rows
        sub_i = jax.lax.broadcasted_iota(jnp.int32, (rows, lane), 0)
        lane_i = jax.lax.broadcasted_iota(jnp.int32, (rows, lane), 1)
        idx = ((row0 + sub_i) * lane + lane_i) % period

    in_band = (idx >= lo) & (idx < hi)
    w = jnp.where(in_band,
                  jnp.asarray(weight_factor, sq.dtype),
                  jnp.asarray(1.0, sq.dtype))
    o_ref[...] = sq * w


def custom_mse_loss(inp, target, weight_factor=WEIGHT_FACTOR):
    assert inp.shape == target.shape and inp.ndim == 3
    B, C, L = inp.shape
    rows = B * C
    total = rows * L
    itemsize = jnp.dtype(inp.dtype).itemsize

    # --- pick a lane-dense 2-D layout (exact reshapes; mask depends only on
    # the index along L, recovered in-kernel) ---
    if L % 128 == 0:
        lane, n_rows, flat_index = L, rows, False
    elif total % 128 == 0:
        lane, n_rows = 128, total // 128
        # If 128 % L == 0 the lane pattern repeats exactly within one 128-wide
        # row; otherwise we need the global flat index in-kernel.
        flat_index = (128 % L != 0)
    else:
        # Ragged fallback: full L as the last dim (full-extent block is legal).
        lane, n_rows, flat_index = L, rows, False

    x2 = inp.reshape(n_rows, lane)
    t2 = target.reshape(n_rows, lane)

    # --- generation-aware tile / VMEM budget ---
    vmem_cap = _vmem_capacity_bytes()
    if vmem_cap >= 96 * 1024 * 1024:       # v5e / v6e (128 MiB physical)
        tile_bytes = 8 * 1024 * 1024
        vmem_limit = 96 * 1024 * 1024
    else:                                   # v7x (64 MiB physical)
        tile_bytes = 4 * 1024 * 1024
        vmem_limit = 48 * 1024 * 1024

    # Sublane packing per dtype: 8 for 32-bit, 16 for bf16/f16, 32 for int8/fp8.
    sub = max(8, 32 // itemsize)
    row_bytes = lane * itemsize

    # Row tile from the byte budget (no artificial row cap).
    tile_r = max(sub, ((tile_bytes // row_bytes) // sub) * sub)

    # Keep >= _TARGET_STEPS grid steps (megacore + pipelining) whenever each
    # step still moves >= ~512 KiB per buffer, so the ~0.35 us per-step
    # overhead stays negligible.
    min_rows_overhead = max(sub, ((_MIN_STEP_BYTES // row_bytes) // sub) * sub)
    steps_cap = ((n_rows // _TARGET_STEPS) // sub) * sub
    if steps_cap >= min_rows_overhead:
        tile_r = min(tile_r, steps_cap)

    if tile_r >= n_rows:
        tile_r = n_rows  # full-extent block is always legal
    grid = (pl.cdiv(n_rows, tile_r),)

    kernel = functools.partial(
        _weighted_mse_kernel,
        weight_factor=float(weight_factor),
        lo=WEIGHT_LO,
        hi=WEIGHT_HI,
        period=L,
        tile_rows=tile_r,
        flat_index=flat_index,
    )

    out2 = pl.pallas_call(
        kernel,
        out_shape=jax.ShapeDtypeStruct((n_rows, lane), inp.dtype),
        grid_spec=pltpu.PrefetchScalarGridSpec(
            num_scalar_prefetch=0,
            grid=grid,
            in_specs=[
                pl.BlockSpec((tile_r, lane), lambda i: (i, 0)),
                pl.BlockSpec((tile_r, lane), lambda i: (i, 0)),
            ],
            out_specs=pl.BlockSpec((tile_r, lane), lambda i: (i, 0)),
        ),
        compiler_params=pltpu.CompilerParams(
            dimension_semantics=("parallel",),
            vmem_limit_bytes=vmem_limit,
        ),
    )(x2, t2)
    return out2.reshape(B, C, L)


def _reference(inp, target, weight_factor=WEIGHT_FACTOR):
    mse = (inp - target) ** 2
    mask = jnp.ones_like(target)
    hi = min(WEIGHT_HI, target.shape[-1])
    if hi > WEIGHT_LO:
        mask = mask.at[:, :, WEIGHT_LO:hi].multiply(weight_factor)
    return mse * mask


if __name__ == "__main__":
    key = jax.random.PRNGKey(0)
    keys = jax.random.split(key, 8)

    def check(B, C, L, ka, kb):
        x = jax.random.normal(ka, (B, C, L), dtype=jnp.float32)
        t = jax.random.normal(kb, (B, C, L), dtype=jnp.float32)
        out = custom_mse_loss(x, t)
        jax.block_until_ready(out)
        ref = _reference(x, t)
        assert out.shape == (B, C, L)
        assert jnp.allclose(out, ref, atol=1e-5, rtol=1e-5), (B, C, L)

    check(2, 4, 64, keys[0], keys[1])    # 128 % L == 0 packed path
    check(2, 4, 128, keys[2], keys[3])   # natural lane-dense path (L % 128 == 0)
    check(2, 4, 48, keys[4], keys[5])    # ragged L, flat-packed 128-lane path
    check(2, 5, 40, keys[6], keys[7])    # fallback full-L-lane path

    print("KERNEL_OK")
</pallas_src>

<mosaic_0001>
module attributes {stable_mosaic.version = 11 : i64} {
  func.func @_weighted_mse_kernel(%arg0: i32, %arg1: memref<4x128xf32, #tpu.memory_space<vmem>>, %arg2: memref<4x128xf32, #tpu.memory_space<vmem>>, %arg3: memref<4x128xf32, #tpu.memory_space<vmem>>) attributes {dimension_semantics = [#tpu.dimension_semantics<parallel>], iteration_bounds = array<i64: 1>, scalar_prefetch = 0 : i64, scratch_operands = 0 : i64, tpu.core_type = #tpu.core_type<tc>, window_params = [{transform_indices = @transform_0, window_bounds = array<i64: 4, 128>}, {transform_indices = @transform_1, window_bounds = array<i64: 4, 128>}, {transform_indices = @transform_2, window_bounds = array<i64: 4, 128>}]} {
    %c0 = arith.constant 0 : index
    %c0_0 = arith.constant 0 : index
    %0 = vector.load %arg1[%c0, %c0_0] : memref<4x128xf32, #tpu.memory_space<vmem>>, vector<4x128xf32>
    %c0_1 = arith.constant 0 : index
    %c0_2 = arith.constant 0 : index
    %1 = vector.load %arg2[%c0_1, %c0_2] : memref<4x128xf32, #tpu.memory_space<vmem>>, vector<4x128xf32>
    %2 = arith.subf %0, %1 : vector<4x128xf32>
    %3 = arith.mulf %2, %2 : vector<4x128xf32>
    %4 = tpu.iota {dimensions = array<i32: 1>} : vector<1x128xi32>
    %c64_i32 = arith.constant 64 : i32
    %c0_i32 = arith.constant 0 : i32
    %5 = arith.cmpi eq, %c64_i32, %c0_i32 : i32
    %c1_i32 = arith.constant 1 : i32
    %6 = arith.select %5, %c1_i32, %c64_i32 : i32
    %7 = vector.broadcast %6 : i32 to vector<1x128xi32>
    %8 = arith.remsi %4, %7 : vector<1x128xi32>
    %c0_i32_3 = arith.constant 0 : i32
    %9 = vector.broadcast %c0_i32_3 : i32 to vector<1x128xi32>
    %10 = arith.cmpi ne, %8, %9 : vector<1x128xi32>
    %c0_i32_4 = arith.constant 0 : i32
    %11 = vector.broadcast %c0_i32_4 : i32 to vector<1x128xi32>
    %12 = arith.cmpi slt, %8, %11 : vector<1x128xi32>
    %c0_i32_5 = arith.constant 0 : i32
    %13 = arith.cmpi slt, %6, %c0_i32_5 : i32
    %14 = vector.broadcast %13 : i1 to vector<1x128xi1>
    %15 = vector.broadcast %14 : vector<1x128xi1> to vector<1x128xi1>
    %16 = arith.xori %12, %15 : vector<1x128xi1>
    %17 = arith.andi %16, %10 : vector<1x128xi1>
    %18 = vector.broadcast %6 : i32 to vector<1x128xi32>
    %19 = arith.addi %8, %18 : vector<1x128xi32>
    %20 = arith.select %17, %19, %8 : vector<1x128xi1>, vector<1x128xi32>
    %c20_i32 = arith.constant 20 : i32
    %21 = vector.broadcast %c20_i32 : i32 to vector<1x128xi32>
    %22 = arith.cmpi sge, %20, %21 : vector<1x128xi32>
    %c40_i32 = arith.constant 40 : i32
    %23 = vector.broadcast %c40_i32 : i32 to vector<1x128xi32>
    %24 = arith.cmpi slt, %20, %23 : vector<1x128xi32>
    %25 = arith.andi %22, %24 : vector<1x128xi1>
    %cst = arith.constant 2.000000e+00 : f32
    %cst_6 = arith.constant 1.000000e+00 : f32
    %26 = vector.broadcast %cst : f32 to vector<1x128xf32>
    %27 = vector.broadcast %cst_6 : f32 to vector<1x128xf32>
    %28 = arith.select %25, %26, %27 : vector<1x128xi1>, vector<1x128xf32>
    %29 = vector.broadcast %28 : vector<1x128xf32> to vector<4x128xf32>
    %30 = arith.mulf %3, %29 : vector<4x128xf32>
    %c0_7 = arith.constant 0 : index
    %c0_8 = arith.constant 0 : index
    %31 = vector.load %arg3[%c0_7, %c0_8] : memref<4x128xf32, #tpu.memory_space<vmem>>, vector<4x128xf32>
    tpu.vector_store %arg3[%c0_7, %c0_8], %30 {strides = array<i32>} : memref<4x128xf32, #tpu.memory_space<vmem>>, vector<4x128xf32>,
    return
  }
  func.func @transform_0(%arg0: i32) -> (i32, i32) {
    %c0_i32 = arith.constant 0 : i32
    %c0_i32_0 = arith.constant 0 : i32
    return %arg0, %c0_i32 : i32, i32
  }
  func.func @transform_1(%arg0: i32) -> (i32, i32) {
    %c0_i32 = arith.constant 0 : i32
    %c0_i32_0 = arith.constant 0 : i32
    return %arg0, %c0_i32 : i32, i32
  }
  func.func @transform_2(%arg0: i32) -> (i32, i32) {
    %c0_i32 = arith.constant 0 : i32
    %c0_i32_0 = arith.constant 0 : i32
    return %arg0, %c0_i32 : i32, i32
  }
}

</mosaic_0001>

<llo_original>
// kernel: tpu_custom_call.1
$region0: #{tpu_custom_call.1}
  #allocation0 [shape = 'u32[]', space=smem, size = 0x4, offset = 0x4, fixed_abs, tag = 'smem constant byte address 0x4 - core index']
  #allocation1 [shape = 'u32[72,128]{1,0:T(1,128)}', space=vmem, size = 0x9000, scoped, tag = 'internal scratch']
  %s0 = inlined_call_operand.hbm [shape: f32[4,128], index: 0, kind: input, shape index: {}]
  %s1 = inlined_call_operand.hbm [shape: f32[4,128], index: 1, kind: input, shape index: {}]
  %s2 = inlined_call_operand.hbm [shape: f32[4,128], index: 2, kind: output, shape index: {}]
  %s3 = sld [smem:[#allocation0]]
  $region26: #{tpu_custom_call.1} parent=0
    _
  %s5 = ssub.s32 1, %s3
  %s6 = scalar_select 0, %s5, %s3
  $region1: #{tpu_custom_call.1} parent=0
    #allocation2 [shape = 'u8[2048]{0}', space=vmem, size = 0x800, scoped, tag = 'input window, operand 0, single buffered']
    #allocation3 [shape = 's32[1]{0}', space=sflag, size = 0x4, scoped, tag = 'scoped memory for tpu_custom_call.1']
    #allocation4 [shape = 's32[1]{0}', space=sflag, size = 0x4, scoped, tag = 'scoped memory for tpu_custom_call.1']
    #allocation5 [shape = 'u8[2048]{0}', space=vmem, size = 0x800, scoped, tag = 'input window, operand 1, single buffered']
    #allocation6 [shape = 's32[1]{0}', space=sflag, size = 0x4, scoped, tag = 'scoped memory for tpu_custom_call.1']
    #allocation7 [shape = 'u8[2048]{0}', space=vmem, size = 0x800, scoped, tag = 'output window, operand 0, single buffered']
    %7 = vsyncpa [#allocation3], 0
    %8 = vsyncpa [#allocation6], 0
    %9 = vsyncpa [#allocation4], 0
    // Predicated region
    $region2: #{tpu_custom_call.1} parent=1 // pred_check
      _
    $region3: #{tpu_custom_call.1} parent=1 // pred_check_branch
      %11 = sbr.rel (0) target = $region5
    $region4: #{tpu_custom_call.1} parent=1 // pred_region
      %13 = vsyncadd [#allocation3], 0
      %s15 = sshll.u32 %s0, 4
      %s16 = int_to_ptr.hbm [resolvable:$true] %s15
      %s17 = sshll.u32 [#allocation2], 4
      %s18 = int_to_ptr.vmem [resolvable:$true] %s17
      %20 = dma.hbm_to_vmem [thread:$0]  %s16, 64, %s18, [#allocation3]
    $region5: #{tpu_custom_call.1} parent=1 // pred_fallthru
      _
    // Predicated region
    $region6: #{tpu_custom_call.1} parent=1 // pred_check
      _
    $region7: #{tpu_custom_call.1} parent=1 // pred_check_branch
      %22 = sbr.rel (0) target = $region9
    $region8: #{tpu_custom_call.1} parent=1 // pred_region
      %24 = vsyncadd [#allocation6], 0
      %s26 = sshll.u32 %s1, 4
      %s27 = int_to_ptr.hbm [resolvable:$true] %s26
      %s28 = sshll.u32 [#allocation5], 4
      %s29 = int_to_ptr.vmem [resolvable:$true] %s28
      %31 = dma.hbm_to_vmem [thread:$0]  %s27, 64, %s29, [#allocation6]
    $region9: #{tpu_custom_call.1} parent=1 // pred_fallthru
      _
    // Predicated region
    $region10: #{tpu_custom_call.1} parent=1 // pred_check
      _
    $region11: #{tpu_custom_call.1} parent=1 // pred_check_branch
      %33 = sbr.rel (0) target = $region13
    $region12: #{tpu_custom_call.1} parent=1 // pred_region
      %35 = dma.done [#allocation3], 64
    $region13: #{tpu_custom_call.1} parent=1 // pred_fallthru
      _
    // Predicated region
    $region14: #{tpu_custom_call.1} parent=1 // pred_check
      _
    $region15: #{tpu_custom_call.1} parent=1 // pred_check_branch
      %37 = sbr.rel (0) target = $region17
    $region16: #{tpu_custom_call.1} parent=1 // pred_region
      %39 = dma.done [#allocation6], 64
    $region17: #{tpu_custom_call.1} parent=1 // pred_fallthru
      _
    %v40 = vld [vmem:[#allocation2] sm:$0xf]
    %v41 = vld [vmem:[#allocation5] sm:$0xf]
    %v42 = vsub.f32 %v40, %v41
    %v43 = vmul.f32 %v42, %v42
    %v44 = vlaneseq
    %v45 = vand.u32 %v44, 127
    %vm46 = vcmp.lt.s32.totalorder %v45, 0
    %v47 = vsub.s32 0, %v45
    %v48 = vsel %vm46, %v47, %v45
    %v49 = vshrl.u32 %v48, 6
    %v50 = vand.u32 %v48, 63
    %v51 = vsub.s32 0, %v50
    %v52 = vsel %vm46, %v51, %v50
    %vm53 = vcmp.ne.s32.totalorder %v52, 0
    %vm54 = vcmp.lt.s32.totalorder %v52, 0
    %vm55 = vmand %vm54, %vm53
    %v56 = vadd.s32 %v52, 64
    %v57 = vsel %vm55, %v56, %v52
    %vm58 = vcmp.ge.s32.totalorder %v57, 20
    %vm59 = vcmp.lt.s32.totalorder %v57, 40
    %vm60 = vmand %vm58, %vm59
    %v61 = vsel %vm60, 2.0, 1.0
    %v62 = vmul.f32 %v43, %v61
    %63 = vst [vmem:[#allocation7] sm:$0xf] %v62
    // Predicated region
    $region18: #{tpu_custom_call.1} parent=1 // pred_check
      _
    $region19: #{tpu_custom_call.1} parent=1 // pred_check_branch
      %65 = sbr.rel (0) target = $region21
    $region20: #{tpu_custom_call.1} parent=1 // pred_region
      %67 = vsyncadd [#allocation4], 0
      %s69 = sshll.u32 [#allocation7], 4
      %s70 = int_to_ptr.vmem [resolvable:$true] %s69
      %s71 = sshll.u32 %s2, 4
      %s72 = int_to_ptr.hbm [resolvable:$true] %s71
      %74 = dma.vmem_to_hbm [thread:$0]  %s70, 64, %s72, [#allocation4]
    $region21: #{tpu_custom_call.1} parent=1 // pred_fallthru
      _
    // Predicated region
    $region22: #{tpu_custom_call.1} parent=1 // pred_check
      _
    $region23: #{tpu_custom_call.1} parent=1 // pred_check_branch
      %76 = sbr.rel (0) target = $region25
    $region24: #{tpu_custom_call.1} parent=1 // pred_region
      %78 = dma.done [#allocation4], 64
    $region25: #{tpu_custom_call.1} parent=1 // pred_fallthru
      _
    %79 = vsyncpa [#allocation3], 1
    %80 = vsyncpa [#allocation6], 1
    %81 = vsyncpa [#allocation4], 1

</llo_original>
